<compile_context>
chip_gen: v5e
topology: v5e:2x2
jax: 0.10.0
libtpu: 0.0.40
codegen_flags: <defaults>
</compile_context>

<pallas_src>
import functools

import jax
import jax.numpy as jnp
from jax.experimental import pallas as pl
from jax.experimental.pallas import tpu as pltpu

STATE_DIM = 128
OFFSET_DIM = 128
TARGET_DIM = 128
HIDDEN_DIM = 512
OUT_DIM = 256
MAX_TTA = 64

PLU_ALPHA = 0.1
PLU_C = 1.0


def _plu(x, alpha=PLU_ALPHA, c=PLU_C):
    # Identical to the PyTorch o1..o4 formulation:
    #   o3 = min(x, alpha*(x-c)+c) ; o4 = max(alpha*(x+c)-c, o3)
    o1 = alpha * (x + c) - c
    o2 = alpha * (x - c) + c
    return jnp.maximum(o1, jnp.minimum(x, o2))


def _make_encoder_kernel(with_noise):
    def kernel(tta_ref, x_ref, *rest):
        if with_noise:
            (noise_ref, ztta_ref, w0_ref, b0_ref, w1_ref, b1_ref, out_ref) = rest
        else:
            (ztta_ref, w0_ref, b0_ref, w1_ref, b1_ref, out_ref) = rest

        # Only the tta-selected row was DMA'd (selection done in the index_map
        # via the scalar-prefetch ref) -> (1, OUT_DIM) f32.
        ztta_row = ztta_ref[0]

        xi = x_ref[...]                                      # (TB, 128) bf16
        h = jnp.dot(xi, w0_ref[...], preferred_element_type=jnp.float32)
        h = _plu(h + b0_ref[...])                            # (TB, 512) f32
        y = jnp.dot(h.astype(jnp.bfloat16), w1_ref[...],
                    preferred_element_type=jnp.float32)
        y = y + b1_ref[...] + ztta_row                       # (TB, 256) f32

        if with_noise:
            tta = tta_ref[0]                                 # int32 scalar (SMEM)
            ttaf = tta.astype(jnp.float32)
            ztarget = jnp.where(
                tta >= 30, jnp.float32(1.0),
                jnp.where(tta < 5, jnp.float32(0.0), (ttaf - 5.0) / 25.0))
            y = y + noise_ref[...] * ztarget                 # zeros for branch 0

        # This grid step's branch result: one lane-aligned (TB, 256) store.
        out_ref[...] = y

    return kernel


def make_ztta(max_tta=MAX_TTA, out_dim=OUT_DIM):
    pos = jnp.arange(max_tta, dtype=jnp.float32)[:, None]
    basis = jnp.power(10000.0,
                      jnp.arange(out_dim, dtype=jnp.float32) / -out_dim)[None, :]
    ang = pos * basis
    ztta = jnp.zeros((max_tta, out_dim), jnp.float32)
    ztta = ztta.at[:, 0::2].set(jnp.sin(ang[:, 0::2]))
    ztta = ztta.at[:, 1::2].set(jnp.cos(ang[:, 1::2]))
    return ztta


def make_params(key):
    """Deterministic PyTorch-Linear-style init; weights stored (in, out), f32."""
    def linear(k, fan_in, fan_out):
        kw, kb = jax.random.split(k)
        bound = 1.0 / jnp.sqrt(jnp.float32(fan_in))
        w = jax.random.uniform(kw, (fan_in, fan_out), jnp.float32, -bound, bound)
        b = jax.random.uniform(kb, (1, fan_out), jnp.float32, -bound, bound)
        return w, b

    ks = jax.random.split(key, 6)
    p = {}
    p["sw0"], p["sb0"] = linear(ks[0], STATE_DIM, HIDDEN_DIM)
    p["sw1"], p["sb1"] = linear(ks[1], HIDDEN_DIM, OUT_DIM)
    p["ow0"], p["ob0"] = linear(ks[2], OFFSET_DIM, HIDDEN_DIM)
    p["ow1"], p["ob1"] = linear(ks[3], HIDDEN_DIM, OUT_DIM)
    p["tw0"], p["tb0"] = linear(ks[4], TARGET_DIM, HIDDEN_DIM)
    p["tw1"], p["tb1"] = linear(ks[5], HIDDEN_DIM, OUT_DIM)
    return p


def pack_params(p):
    """Pack the six Linears into 4 tensors; weights quantized to bf16 for DMA."""
    w0 = jnp.concatenate([p["sw0"], p["ow0"], p["tw0"]], axis=1).astype(jnp.bfloat16)
    b0 = jnp.concatenate([p["sb0"], p["ob0"], p["tb0"]], axis=1).astype(jnp.float32)
    w1 = jnp.concatenate([p["sw1"], p["ow1"], p["tw1"]], axis=1).astype(jnp.bfloat16)
    b1 = jnp.concatenate([p["sb1"], p["ob1"], p["tb1"]], axis=1).astype(jnp.float32)
    return {"w0": w0, "b0": b0, "w1": w1, "b1": b1}


def _ztarget_schedule(tta):
    if tta >= 30:
        return 1.0
    elif tta < 5:
        return 0.0
    else:
        return (tta - 5) / 25


@functools.partial(jax.jit, static_argnames=("with_noise",))
def _encoder_call(packed, ztta3, x, tta_arr, noise3, with_noise):
    B_pad = x.shape[0]
    TB = B_pad if B_pad <= 256 else 256          # wrapper guarantees divisibility
    nb = B_pad // TB
    grid = (nb, 3)                               # (batch tiles, branches)

    in_specs = [
        # packed [state|offset|target] inputs, bf16, one 128-wide branch slice
        pl.BlockSpec((TB, STATE_DIM), lambda i, j, tta: (i, j)),
    ]
    args = [x]
    if with_noise:
        # noise zero-padded to (B_pad, 768); branch 0 slice is all zeros
        in_specs.append(pl.BlockSpec((TB, OUT_DIM), lambda i, j, tta: (i, j)))
        args.append(noise3)
    in_specs += [
        # ztta reshaped to (MAX_TTA, 1, OUT_DIM): fetch only row `tta`
        pl.BlockSpec((1, 1, OUT_DIM), lambda i, j, tta: (tta[0], 0, 0)),
        # layer-0 / layer-1 weights & biases: per-branch column slices
        pl.BlockSpec((STATE_DIM, HIDDEN_DIM), lambda i, j, tta: (0, j)),
        pl.BlockSpec((1, HIDDEN_DIM), lambda i, j, tta: (0, j)),
        pl.BlockSpec((HIDDEN_DIM, OUT_DIM), lambda i, j, tta: (0, j)),
        pl.BlockSpec((1, OUT_DIM), lambda i, j, tta: (0, j)),
    ]
    args += [ztta3, packed["w0"], packed["b0"], packed["w1"], packed["b1"]]

    grid_spec = pltpu.PrefetchScalarGridSpec(
        num_scalar_prefetch=1,
        grid=grid,
        in_specs=in_specs,
        out_specs=pl.BlockSpec((TB, OUT_DIM), lambda i, j, tta: (i, j)),
    )
    return pl.pallas_call(
        _make_encoder_kernel(with_noise),
        out_shape=jax.ShapeDtypeStruct((B_pad, 3 * OUT_DIM), jnp.float32),
        grid_spec=grid_spec,
        compiler_params=pltpu.CompilerParams(
            dimension_semantics=("parallel", "parallel")),
    )(tta_arr, *args)


def rnn_encoder_forward(packed, ztta, state, offset, target, tta, noise=None):
    """state: (B,1,128), offset: (B,1,128), target: (B,128) or (B,1,128),
    tta: python int or int32 scalar, noise: (B,1,512) or None.
    Returns (B, 1, 768) = [state_enc | offset_enc | target_enc]."""
    B = state.shape[0]
    x = jnp.concatenate(
        [state.reshape(B, STATE_DIM),
         offset.reshape(B, OFFSET_DIM),
         target.reshape(B, TARGET_DIM)], axis=1).astype(jnp.bfloat16)

    # Pad batch to a sublane multiple; tile by 256 rows when large.
    if B <= 256:
        B_pad = max(8, ((B + 7) // 8) * 8)
    else:
        B_pad = ((B + 255) // 256) * 256
    if B_pad != B:
        x = jnp.pad(x, ((0, B_pad - B), (0, 0)))

    # Clamp tta so the index_map row select is always in bounds.
    tta_arr = jnp.clip(jnp.asarray(tta, jnp.int32), 0, MAX_TTA - 1).reshape(1)
    ztta3 = ztta.astype(jnp.float32).reshape(MAX_TTA, 1, OUT_DIM)

    with_noise = noise is not None
    if with_noise:
        n = noise.reshape(B, 2 * OUT_DIM).astype(jnp.float32)
        noise3 = jnp.concatenate(
            [jnp.zeros((B, OUT_DIM), jnp.float32), n], axis=1)   # (B, 768)
        if B_pad != B:
            noise3 = jnp.pad(noise3, ((0, B_pad - B), (0, 0)))
    else:
        noise3 = None

    out = _encoder_call(packed, ztta3, x, tta_arr, noise3, with_noise)
    return out[:B].reshape(B, 1, 3 * OUT_DIM)


def reference_forward(params, ztta, state, offset, target, tta, noise=None):
    """Pure-JAX mirror of the PyTorch forward using the same numerical policy
    as the kernel (bf16 operands, f32 accumulation)."""
    B = state.shape[0]
    s = state.reshape(B, STATE_DIM).astype(jnp.float32)
    o = offset.reshape(B, OFFSET_DIM).astype(jnp.float32)
    t = target.reshape(B, TARGET_DIM).astype(jnp.float32)
    bf = jnp.bfloat16

    def mlp(x, w0, b0, w1, b1):
        h = jnp.dot(x.astype(bf), w0.astype(bf),
                    preferred_element_type=jnp.float32) + b0
        h = _plu(h)
        return jnp.dot(h.astype(bf), w1.astype(bf),
                       preferred_element_type=jnp.float32) + b1

    zrow = ztta[tta][None, :]
    state_enc = mlp(s, params["sw0"], params["sb0"],
                    params["sw1"], params["sb1"]) + zrow
    offset_enc = mlp(o, params["ow0"], params["ob0"],
                     params["ow1"], params["ob1"]) + zrow
    target_enc = mlp(t, params["tw0"], params["tb0"],
                     params["tw1"], params["tb1"]) + zrow
    if noise is not None:
        zt = _ztarget_schedule(tta)
        n = noise.reshape(B, 2 * OUT_DIM)
        offset_enc = offset_enc + n[:, :OUT_DIM] * zt
        target_enc = target_enc + n[:, OUT_DIM:] * zt
    out = jnp.concatenate([state_enc, offset_enc, target_enc], axis=-1)
    return out.reshape(B, 1, 3 * OUT_DIM)


if __name__ == "__main__":
    key = jax.random.PRNGKey(0)
    pkey, skey, okey, tkey, nkey = jax.random.split(key, 5)

    params = make_params(pkey)
    packed = pack_params(params)
    ztta = make_ztta()

    B = 8
    tta = 17
    state = jax.random.normal(skey, (B, 1, STATE_DIM), jnp.float32)
    offset = jax.random.normal(okey, (B, 1, OFFSET_DIM), jnp.float32)
    target = jax.random.normal(tkey, (B, TARGET_DIM), jnp.float32)
    noise = jax.random.normal(nkey, (B, 1, 2 * OUT_DIM), jnp.float32)

    # noise path
    out = rnn_encoder_forward(packed, ztta, state, offset, target, tta, noise)
    out = jax.block_until_ready(out)
    ref = reference_forward(params, ztta, state, offset, target, tta, noise)
    assert out.shape == (B, 1, 3 * OUT_DIM), out.shape
    err = float(jnp.max(jnp.abs(out - ref)))
    assert jnp.allclose(out, ref, rtol=1e-3, atol=1e-2), f"max abs err {err}"

    # noise=None specialized path
    out2 = rnn_encoder_forward(packed, ztta, state, offset, target, tta, None)
    out2 = jax.block_until_ready(out2)
    ref2 = reference_forward(params, ztta, state, offset, target, tta, None)
    err2 = float(jnp.max(jnp.abs(out2 - ref2)))
    assert jnp.allclose(out2, ref2, rtol=1e-3, atol=1e-2), f"max abs err {err2}"

    print("KERNEL_OK")
</pallas_src>

<mosaic_0001>
module attributes {stable_mosaic.version = 11 : i64} {
  func.func @kernel(%arg0: i32, %arg1: i32, %arg2: memref<1xi32, #tpu.memory_space<smem>>, %arg3: memref<8x128xbf16, #tpu.memory_space<vmem>>, %arg4: memref<8x256xf32, #tpu.memory_space<vmem>>, %arg5: memref<1x1x256xf32, #tpu.memory_space<vmem>>, %arg6: memref<128x512xbf16, #tpu.memory_space<vmem>>, %arg7: memref<1x512xf32, #tpu.memory_space<vmem>>, %arg8: memref<512x256xbf16, #tpu.memory_space<vmem>>, %arg9: memref<1x256xf32, #tpu.memory_space<vmem>>, %arg10: memref<8x256xf32, #tpu.memory_space<vmem>>) attributes {dimension_semantics = [#tpu.dimension_semantics<parallel>, #tpu.dimension_semantics<parallel>], iteration_bounds = array<i64: 1, 3>, scalar_prefetch = 1 : i64, scratch_operands = 0 : i64, tpu.core_type = #tpu.core_type<tc>, window_params = [{transform_indices = @transform_0, window_bounds = array<i64: 8, 128>}, {transform_indices = @transform_1, window_bounds = array<i64: 8, 256>}, {transform_indices = @transform_2, window_bounds = array<i64: 1, 1, 256>}, {transform_indices = @transform_3, window_bounds = array<i64: 128, 512>}, {transform_indices = @transform_4, window_bounds = array<i64: 1, 512>}, {transform_indices = @transform_5, window_bounds = array<i64: 512, 256>}, {transform_indices = @transform_6, window_bounds = array<i64: 1, 256>}, {transform_indices = @transform_7, window_bounds = array<i64: 8, 256>}]} {
    %c0 = arith.constant 0 : index
    %c0_0 = arith.constant 0 : index
    %c0_1 = arith.constant 0 : index
    %0 = vector.load %arg5[%c0, %c0_0, %c0_1] : memref<1x1x256xf32, #tpu.memory_space<vmem>>, vector<1x1x256xf32>
    %1 = vector.shape_cast %0 : vector<1x1x256xf32> to vector<1x256xf32>
    %c0_2 = arith.constant 0 : index
    %c0_3 = arith.constant 0 : index
    %2 = vector.load %arg3[%c0_2, %c0_3] : memref<8x128xbf16, #tpu.memory_space<vmem>>, vector<8x128xbf16>
    %c0_4 = arith.constant 0 : index
    %c0_5 = arith.constant 0 : index
    %3 = vector.load %arg6[%c0_4, %c0_5] : memref<128x512xbf16, #tpu.memory_space<vmem>>, vector<128x512xbf16>
    %cst = arith.constant dense<0.000000e+00> : vector<8x512xf32>
    %4 = tpu.matmul %2, %3, %cst {dimension_numbers = #tpu.dot_dimension_numbers<[1], [0], [0], [1], [0, 0, 1, 1], [], []>} : vector<8x128xbf16>, vector<128x512xbf16>, vector<8x512xf32> -> vector<8x512xf32>
    %c0_6 = arith.constant 0 : index
    %c0_7 = arith.constant 0 : index
    %5 = vector.load %arg7[%c0_6, %c0_7] : memref<1x512xf32, #tpu.memory_space<vmem>>, vector<1x512xf32>
    %6 = vector.broadcast %5 : vector<1x512xf32> to vector<8x512xf32>
    %7 = arith.addf %4, %6 : vector<8x512xf32>
    %cst_8 = arith.constant 1.000000e+00 : f32
    %8 = vector.broadcast %cst_8 : f32 to vector<8x512xf32>
    %9 = arith.addf %7, %8 : vector<8x512xf32>
    %cst_9 = arith.constant 1.000000e-01 : f32
    %10 = vector.broadcast %cst_9 : f32 to vector<8x512xf32>
    %11 = arith.mulf %10, %9 : vector<8x512xf32>
    %cst_10 = arith.constant 1.000000e+00 : f32
    %12 = vector.broadcast %cst_10 : f32 to vector<8x512xf32>
    %13 = arith.subf %11, %12 : vector<8x512xf32>
    %cst_11 = arith.constant 1.000000e+00 : f32
    %14 = vector.broadcast %cst_11 : f32 to vector<8x512xf32>
    %15 = arith.subf %7, %14 : vector<8x512xf32>
    %cst_12 = arith.constant 1.000000e-01 : f32
    %16 = vector.broadcast %cst_12 : f32 to vector<8x512xf32>
    %17 = arith.mulf %16, %15 : vector<8x512xf32>
    %cst_13 = arith.constant 1.000000e+00 : f32
    %18 = vector.broadcast %cst_13 : f32 to vector<8x512xf32>
    %19 = arith.addf %17, %18 : vector<8x512xf32>
    %20 = arith.minimumf %7, %19 : vector<8x512xf32>
    %21 = arith.maximumf %13, %20 : vector<8x512xf32>
    %22 = arith.truncf %21 : vector<8x512xf32> to vector<8x512xbf16>
    %c0_14 = arith.constant 0 : index
    %c0_15 = arith.constant 0 : index
    %23 = vector.load %arg8[%c0_14, %c0_15] : memref<512x256xbf16, #tpu.memory_space<vmem>>, vector<512x256xbf16>
    %cst_16 = arith.constant dense<0.000000e+00> : vector<8x256xf32>
    %24 = tpu.matmul %22, %23, %cst_16 {dimension_numbers = #tpu.dot_dimension_numbers<[1], [0], [0], [1], [0, 0, 1, 1], [], []>} : vector<8x512xbf16>, vector<512x256xbf16>, vector<8x256xf32> -> vector<8x256xf32>
    %c0_17 = arith.constant 0 : index
    %c0_18 = arith.constant 0 : index
    %25 = vector.load %arg9[%c0_17, %c0_18] : memref<1x256xf32, #tpu.memory_space<vmem>>, vector<1x256xf32>
    %26 = vector.broadcast %25 : vector<1x256xf32> to vector<8x256xf32>
    %27 = arith.addf %24, %26 : vector<8x256xf32>
    %28 = vector.broadcast %1 : vector<1x256xf32> to vector<8x256xf32>
    %29 = arith.addf %27, %28 : vector<8x256xf32>
    %c0_19 = arith.constant 0 : index
    %30 = memref.load %arg2[%c0_19] : memref<1xi32, #tpu.memory_space<smem>>
    %31 = arith.sitofp %30 : i32 to f32
    %c30_i32 = arith.constant 30 : i32
    %32 = arith.cmpi sge, %30, %c30_i32 : i32
    %c5_i32 = arith.constant 5 : i32
    %33 = arith.cmpi slt, %30, %c5_i32 : i32
    %cst_20 = arith.constant 5.000000e+00 : f32
    %34 = arith.subf %31, %cst_20 : f32
    %cst_21 = arith.constant 2.500000e+01 : f32
    %35 = arith.divf %34, %cst_21 : f32
    %cst_22 = arith.constant 0.000000e+00 : f32
    %36 = arith.select %33, %cst_22, %35 : f32
    %cst_23 = arith.constant 1.000000e+00 : f32
    %37 = arith.select %32, %cst_23, %36 : f32
    %c0_24 = arith.constant 0 : index
    %c0_25 = arith.constant 0 : index
    %38 = vector.load %arg4[%c0_24, %c0_25] : memref<8x256xf32, #tpu.memory_space<vmem>>, vector<8x256xf32>
    %39 = vector.broadcast %37 : f32 to vector<8x256xf32>
    %40 = arith.mulf %38, %39 : vector<8x256xf32>
    %41 = arith.addf %29, %40 : vector<8x256xf32>
    %c0_26 = arith.constant 0 : index
    %c0_27 = arith.constant 0 : index
    %42 = vector.load %arg10[%c0_26, %c0_27] : memref<8x256xf32, #tpu.memory_space<vmem>>, vector<8x256xf32>
    tpu.vector_store %arg10[%c0_26, %c0_27], %41 {strides = array<i32>} : memref<8x256xf32, #tpu.memory_space<vmem>>, vector<8x256xf32>,
    return
  }
  func.func @transform_0(%arg0: i32, %arg1: i32, %arg2: memref<1xi32, #tpu.memory_space<smem>>) -> (i32, i32) {
    %c0_i32 = arith.constant 0 : i32
    return %arg0, %arg1 : i32, i32
  }
  func.func @transform_1(%arg0: i32, %arg1: i32, %arg2: memref<1xi32, #tpu.memory_space<smem>>) -> (i32, i32) {
    %c0_i32 = arith.constant 0 : i32
    return %arg0, %arg1 : i32, i32
  }
  func.func @transform_2(%arg0: i32, %arg1: i32, %arg2: memref<1xi32, #tpu.memory_space<smem>>) -> (i32, i32, i32) {
    %c0 = arith.constant 0 : index
    %0 = memref.load %arg2[%c0] : memref<1xi32, #tpu.memory_space<smem>>
    %c0_i32 = arith.constant 0 : i32
    %c0_i32_0 = arith.constant 0 : i32
    %c0_i32_1 = arith.constant 0 : i32
    return %0, %c0_i32, %c0_i32_0 : i32, i32, i32
  }
  func.func @transform_3(%arg0: i32, %arg1: i32, %arg2: memref<1xi32, #tpu.memory_space<smem>>) -> (i32, i32) {
    %c0_i32 = arith.constant 0 : i32
    %c0_i32_0 = arith.constant 0 : i32
    return %c0_i32, %arg1 : i32, i32
  }
  func.func @transform_4(%arg0: i32, %arg1: i32, %arg2: memref<1xi32, #tpu.memory_space<smem>>) -> (i32, i32) {
    %c0_i32 = arith.constant 0 : i32
    %c0_i32_0 = arith.constant 0 : i32
    return %c0_i32, %arg1 : i32, i32
  }
  func.func @transform_5(%arg0: i32, %arg1: i32, %arg2: memref<1xi32, #tpu.memory_space<smem>>) -> (i32, i32) {
    %c0_i32 = arith.constant 0 : i32
    %c0_i32_0 = arith.constant 0 : i32
    return %c0_i32, %arg1 : i32, i32
  }
  func.func @transform_6(%arg0: i32, %arg1: i32, %arg2: memref<1xi32, #tpu.memory_space<smem>>) -> (i32, i32) {
    %c0_i32 = arith.constant 0 : i32
    %c0_i32_0 = arith.constant 0 : i32
    return %c0_i32, %arg1 : i32, i32
  }
  func.func @transform_7(%arg0: i32, %arg1: i32, %arg2: memref<1xi32, #tpu.memory_space<smem>>) -> (i32, i32) {
    %c0_i32 = arith.constant 0 : i32
    return %arg0, %arg1 : i32, i32
  }
}

</mosaic_0001>

<llo_original>
// kernel: _encoder_call.1
$region0: #{_encoder_call.1}
  #allocation0 [shape = 'u32[]', space=smem, size = 0x4, offset = 0x4, fixed_abs, tag = 'smem constant byte address 0x4 - core index']
  #allocation1 [shape = 'u32[72,128]{1,0:T(1,128)}', space=vmem, size = 0x9000, scoped, tag = 'internal scratch']
  #allocation2 [shape = 's32[1]{0}', space=sflag, size = 0x4, scoped, tag = 'scoped memory for _encoder_call.1']
  #allocation3 [shape = 's32[1]{0:T(128)S(6)}', space=smem, size = 0x200, scoped, tag = 'prefetched SMEM operand 0']
  %s0 = inlined_call_operand.<no memory space> [shape: s32[1], index: 0, kind: input, shape index: {}]
  %s1 = inlined_call_operand.hbm [shape: bf16[8,384], index: 1, kind: input, shape index: {}]
  %s2 = inlined_call_operand.hbm [shape: f32[8,768], index: 2, kind: input, shape index: {}]
  %s3 = inlined_call_operand.hbm [shape: f32[64,1,256], index: 3, kind: input, shape index: {}]
  %s4 = inlined_call_operand.hbm [shape: bf16[128,1536], index: 4, kind: input, shape index: {}]
  %s5 = inlined_call_operand.hbm [shape: f32[1,1536], index: 5, kind: input, shape index: {}]
  %s6 = inlined_call_operand.hbm [shape: bf16[512,768], index: 6, kind: input, shape index: {}]
  %s7 = inlined_call_operand.hbm [shape: f32[1,768], index: 7, kind: input, shape index: {}]
  %s8 = inlined_call_operand.hbm [shape: f32[8,768], index: 8, kind: output, shape index: {}]
  %s9 = sld [smem:[#allocation0]]
  $region89: #{_encoder_call.1} parent=0
    _
  %s11 = ssub.s32 1, %s9
  %s12 = scalar_select 0, %s11, %s9
  %13 = sst [smem:[#allocation3]] %s0
  $region1: #{_encoder_call.1} parent=0
    #allocation4 [shape = 'u8[4096]{0}', space=vmem, size = 0x1000, scoped, tag = 'input window, operand 1']
    #allocation5 [shape = 's32[2]{0}', space=sflag, size = 0x8, scoped, tag = 'scoped memory for _encoder_call.1']
    #allocation6 [shape = 's32[2]{0}', space=sflag, size = 0x8, scoped, tag = 'scoped memory for _encoder_call.1']
    #allocation7 [shape = 'u8[16384]{0}', space=vmem, size = 0x4000, scoped, tag = 'input window, operand 2']
    #allocation8 [shape = 's32[2]{0}', space=sflag, size = 0x8, scoped, tag = 'scoped memory for _encoder_call.1']
    #allocation9 [shape = 'u8[1024]{0}', space=vmem, size = 0x400, scoped, tag = 'input window, operand 3, single buffered']
    #allocation10 [shape = 'u8[262144]{0}', space=vmem, size = 0x40000, scoped, tag = 'input window, operand 4']
    #allocation11 [shape = 's32[2]{0}', space=sflag, size = 0x8, scoped, tag = 'scoped memory for _encoder_call.1']
    #allocation12 [shape = 'u8[4096]{0}', space=vmem, size = 0x1000, scoped, tag = 'input window, operand 5']
    #allocation13 [shape = 'u8[524288]{0}', space=vmem, size = 0x80000, scoped, tag = 'input window, operand 6']
    #allocation14 [shape = 's32[2]{0}', space=sflag, size = 0x8, scoped, tag = 'scoped memory for _encoder_call.1']
    #allocation15 [shape = 'u8[2048]{0}', space=vmem, size = 0x800, scoped, tag = 'input window, operand 7']
    #allocation16 [shape = 'u8[16384]{0}', space=vmem, size = 0x4000, scoped, tag = 'output window, operand 0']
    %14 = vsyncpa [#allocation5], 0
    %s15 = scalar_lea.sflag [#allocation5], 1
    %16 = vsyncpa %s15, 0
    %17 = vsyncpa [#allocation8], 0
    %s18 = scalar_lea.sflag [#allocation8], 1
    %19 = vsyncpa %s18, 0
    %20 = vsyncpa [#allocation11], 0
    %s21 = scalar_lea.sflag [#allocation11], 1
    %22 = vsyncpa %s21, 0
    %23 = vsyncpa [#allocation14], 0
    %s24 = scalar_lea.sflag [#allocation14], 1
    %25 = vsyncpa %s24, 0
    %26 = vsyncpa [#allocation6], 0
    %s27 = scalar_lea.sflag [#allocation6], 1
    %28 = vsyncpa %s27, 0
    loop: start=0, step=1, limit=5
    $region2: #{_encoder_call.1} parent=1 // loop_pre_header
      _
    $region3: #{_encoder_call.1} parent=1 // loop_header
      %s30 = sphi 0, %s34
      %p31 = scmp.ge.s32.totalorder %s30, 5
      %s37 = sphi 0, %s49
      %s38 = sphi 0, %s45
      %s39 = sphi 0, %s37
      %s40 = sphi 0, %s38
      %s41 = sphi 0, %s39
      %s42 = sphi 0, %s40
      %s54 = sphi 0, %s56
      %s57 = sphi 0, %s54
      %s58 = sphi 0, %s57
      %s74 = sphi 0, %s58
      %s82 = sphi 0, %s84
      %s85 = sphi 0, %s82
      %s86 = sphi 0, %s85
      %s102 = sphi 0, %s86
      %s110 = sphi 0, %s112
      %s113 = sphi 0, %s110
      %s114 = sphi 0, %s113
      %s130 = sphi 0, %s114
      %s136 = sphi 0, %s138
      %s139 = sphi 0, %s136
      %s140 = sphi 0, %s139
      %s156 = sphi 0, %s140
      %s162 = sphi 0, %s164
      %s165 = sphi 0, %s162
      %s166 = sphi 0, %s165
      %s182 = sphi 0, %s166
      %s188 = sphi 0, %s190
      %s191 = sphi 0, %s188
      %s192 = sphi 0, %s191
      %s208 = sphi 0, %s192
      %s214 = sphi 0, %s216
      %s217 = sphi 0, %s214
      %s218 = sphi 0, %s217
      %s234 = sphi 0, %s218
      %s242 = sphi 0, %s244
      %s245 = sphi 0, %s242
      %s246 = sphi 0, %s245
      %s262 = sphi 0, %s246
    $region4: #{_encoder_call.1} parent=1 // loop_header_branch
      %33 = sbr.rel (%p31) target = $region8
    $region5: #{_encoder_call.1} parent=1 // loop_body
      %s35 = ssub.s32 %s30, 1
      %s36 = ssub.s32 %s30, 2
      %s43 = sadd.s32 1, %s38
      %p44 = scmp.ge.s32.totalorder %s43, 3
      %s45 = scalar_select %p44, 0, %s43
      %s46 = sadd.s32 1, %s37
      %s47 = scalar_select %p44, %s46, %s37
      %p48 = scmp.ge.s32.totalorder %s47, 1
      %s49 = scalar_select %p48, 0, %s47
      %s50 = ssub.s32 %s37, %s49
      %s51 = ssub.s32 %s38, %s45
      %s52 = sor.u32 %s50, %s51
      %p53 = scmp.eq.s32.totalorder %s52, 0
      %s55 = sadd.s32 %s54, 1
      %s56 = scalar_select %p53, %s54, %s55
      %p59 = pneg %p53
      %p60 = scmp.eq.s32.totalorder %s30, 2
      %p61 = por %p59, %p60
      %p62 = scmp.ne.s32.totalorder %s54, %s57
      %p63 = scmp.eq.s32.totalorder %s30, 0
      %p64 = por %p62, %p63
      %p65 = scmp.ne.s32.totalorder %s54, %s57
      %p66 = scmp.eq.s32.totalorder %s35, 2
      %p67 = por %p65, %p66
      %p68 = scmp.ne.s32.totalorder %s57, %s58
      %p69 = scmp.eq.s32.totalorder %s35, 0
      %p70 = por %p68, %p69
      %p71 = scmp.ne.s32.totalorder %s57, %s58
      %p72 = scmp.eq.s32.totalorder %s36, 2
      %p73 = por %p71, %p72
      %p75 = scmp.ne.s32.totalorder %s58, %s74
      %p76 = scmp.eq.s32.totalorder %s36, 0
      %p77 = por %p75, %p76
      %s78 = ssub.s32 %s37, %s49
      %s79 = ssub.s32 %s38, %s45
      %s80 = sor.u32 %s78, %s79
      %p81 = scmp.eq.s32.totalorder %s80, 0
      %s83 = sadd.s32 %s82, 1
      %s84 = scalar_select %p81, %s82, %s83
      %p87 = pneg %p81
      %p88 = scmp.eq.s32.totalorder %s30, 2
      %p89 = por %p87, %p88
      %p90 = scmp.ne.s32.totalorder %s82, %s85
      %p91 = scmp.eq.s32.totalorder %s30, 0
      %p92 = por %p90, %p91
      %p93 = scmp.ne.s32.totalorder %s82, %s85
      %p94 = scmp.eq.s32.totalorder %s35, 2
      %p95 = por %p93, %p94
      %p96 = scmp.ne.s32.totalorder %s85, %s86
      %p97 = scmp.eq.s32.totalorder %s35, 0
      %p98 = por %p96, %p97
      %p99 = scmp.ne.s32.totalorder %s85, %s86
      %p100 = scmp.eq.s32.totalorder %s36, 2
      %p101 = por %p99, %p100
      %p103 = scmp.ne.s32.totalorder %s86, %s102
      %p104 = scmp.eq.s32.totalorder %s36, 0
      %p105 = por %p103, %p104
      %s106 = sld [smem:[#allocation3]]
      %s107 = sld [smem:[#allocation3]]
      %s108 = ssub.s32 %s106, %s107
      %p109 = scmp.eq.s32.totalorder %s108, 0
      %s111 = sadd.s32 %s110, 1
      %s112 = scalar_select %p109, %s110, %s111
      %p115 = pneg %p109
      %p116 = scmp.eq.s32.totalorder %s30, 2
      %p117 = por %p115, %p116
      %p118 = scmp.ne.s32.totalorder %s110, %s113
      %p119 = scmp.eq.s32.totalorder %s30, 0
      %p120 = por %p118, %p119
      %p121 = scmp.ne.s32.totalorder %s110, %s113
      %p122 = scmp.eq.s32.totalorder %s35, 2
      %p123 = por %p121, %p122
      %p124 = scmp.ne.s32.totalorder %s113, %s114
      %p125 = scmp.eq.s32.totalorder %s35, 0
      %p126 = por %p124, %p125
      %p127 = scmp.ne.s32.totalorder %s113, %s114
      %p128 = scmp.eq.s32.totalorder %s36, 2
      %p129 = por %p127, %p128
      %p131 = scmp.ne.s32.totalorder %s114, %s130
      %p132 = scmp.eq.s32.totalorder %s36, 0
      %p133 = por %p131, %p132
      %s134 = ssub.s32 %s38, %s45
      %p135 = scmp.eq.s32.totalorder %s134, 0
      %s137 = sadd.s32 %s136, 1
      %s138 = scalar_select %p135, %s136, %s137
      %p141 = pneg %p135
      %p142 = scmp.eq.s32.totalorder %s30, 2
      %p143 = por %p141, %p142
      %p144 = scmp.ne.s32.totalorder %s136, %s139
      %p145 = scmp.eq.s32.totalorder %s30, 0
      %p146 = por %p144, %p145
      %p147 = scmp.ne.s32.totalorder %s136, %s139
      %p148 = scmp.eq.s32.totalorder %s35, 2
      %p149 = por %p147, %p148
      %p150 = scmp.ne.s32.totalorder %s139, %s140
      %p151 = scmp.eq.s32.totalorder %s35, 0
      %p152 = por %p150, %p151
      %p153 = scmp.ne.s32.totalorder %s139, %s140
      %p154 = scmp.eq.s32.totalorder %s36, 2
      %p155 = por %p153, %p154
      %p157 = scmp.ne.s32.totalorder %s140, %s156
      %p158 = scmp.eq.s32.totalorder %s36, 0
      %p159 = por %p157, %p158
      %s160 = ssub.s32 %s38, %s45
      %p161 = scmp.eq.s32.totalorder %s160, 0
      %s163 = sadd.s32 %s162, 1
      %s164 = scalar_select %p161, %s162, %s163
      %p167 = pneg %p161
      %p168 = scmp.eq.s32.totalorder %s30, 2
      %p169 = por %p167, %p168
      %p170 = scmp.ne.s32.totalorder %s162, %s165
      %p171 = scmp.eq.s32.totalorder %s30, 0
      %p172 = por %p170, %p171
      %p173 = scmp.ne.s32.totalorder %s162, %s165
      %p174 = scmp.eq.s32.totalorder %s35, 2
      %p175 = por %p173, %p174
      %p176 = scmp.ne.s32.totalorder %s165, %s166
      %p177 = scmp.eq.s32.totalorder %s35, 0
      %p178 = por %p176, %p177
      %p179 = scmp.ne.s32.totalorder %s165, %s166
      %p180 = scmp.eq.s32.totalorder %s36, 2
      %p181 = por %p179, %p180
      %p183 = scmp.ne.s32.totalorder %s166, %s182
      %p184 = scmp.eq.s32.totalorder %s36, 0
      %p185 = por %p183, %p184
      %s186 = ssub.s32 %s38, %s45
      %p187 = scmp.eq.s32.totalorder %s186, 0
      %s189 = sadd.s32 %s188, 1
      %s190 = scalar_select %p187, %s188, %s189
      %p193 = pneg %p187
      %p194 = scmp.eq.s32.totalorder %s30, 2
      %p195 = por %p193, %p194
      %p196 = scmp.ne.s32.totalorder %s188, %s191
      %p197 = scmp.eq.s32.totalorder %s30, 0
      %p198 = por %p196, %p197
      %p199 = scmp.ne.s32.totalorder %s188, %s191
      %p200 = scmp.eq.s32.totalorder %s35, 2
      %p201 = por %p199, %p200
      %p202 = scmp.ne.s32.totalorder %s191, %s192
      %p203 = scmp.eq.s32.totalorder %s35, 0
      %p204 = por %p202, %p203
      %p205 = scmp.ne.s32.totalorder %s191, %s192
      %p206 = scmp.eq.s32.totalorder %s36, 2
      %p207 = por %p205, %p206
      %p209 = scmp.ne.s32.totalorder %s192, %s208
      %p210 = scmp.eq.s32.totalorder %s36, 0
      %p211 = por %p209, %p210
      %s212 = ssub.s32 %s38, %s45
      %p213 = scmp.eq.s32.totalorder %s212, 0
      %s215 = sadd.s32 %s214, 1
      %s216 = scalar_select %p213, %s214, %s215
      %p219 = pneg %p213
      %p220 = scmp.eq.s32.totalorder %s30, 2
      %p221 = por %p219, %p220
      %p222 = scmp.ne.s32.totalorder %s214, %s217
      %p223 = scmp.eq.s32.totalorder %s30, 0
      %p224 = por %p222, %p223
      %p225 = scmp.ne.s32.totalorder %s214, %s217
      %p226 = scmp.eq.s32.totalorder %s35, 2
      %p227 = por %p225, %p226
      %p228 = scmp.ne.s32.totalorder %s217, %s218
      %p229 = scmp.eq.s32.totalorder %s35, 0
      %p230 = por %p228, %p229
      %p231 = scmp.ne.s32.totalorder %s217, %s218
      %p232 = scmp.eq.s32.totalorder %s36, 2
      %p233 = por %p231, %p232
      %p235 = scmp.ne.s32.totalorder %s218, %s234
      %p236 = scmp.eq.s32.totalorder %s36, 0
      %p237 = por %p235, %p236
      %s238 = ssub.s32 %s37, %s49
      %s239 = ssub.s32 %s38, %s45
      %s240 = sor.u32 %s238, %s239
      %p241 = scmp.eq.s32.totalorder %s240, 0
      %s243 = sadd.s32 %s242, 1
      %s244 = scalar_select %p241, %s242, %s243
      %p247 = pneg %p241
      %p248 = scmp.eq.s32.totalorder %s30, 2
      %p249 = por %p247, %p248
      %p250 = scmp.ne.s32.totalorder %s242, %s245
      %p251 = scmp.eq.s32.totalorder %s30, 0
      %p252 = por %p250, %p251
      %p253 = scmp.ne.s32.totalorder %s242, %s245
      %p254 = scmp.eq.s32.totalorder %s35, 2
      %p255 = por %p253, %p254
      %p256 = scmp.ne.s32.totalorder %s245, %s246
      %p257 = scmp.eq.s32.totalorder %s35, 0
      %p258 = por %p256, %p257
      %p259 = scmp.ne.s32.totalorder %s245, %s246
      %p260 = scmp.eq.s32.totalorder %s36, 2
      %p261 = por %p259, %p260
      %p263 = scmp.ne.s32.totalorder %s246, %s262
      %p264 = scmp.eq.s32.totalorder %s36, 0
      %p265 = por %p263, %p264
      %p266 = scmp.le.s32.totalorder 1, %s30
      %p267 = scmp.lt.s32.totalorder %s30, 4
      %p268 = pnand %p266, %p267
      %p269 = pneg %p268
      // Predicated region
      $region9: #{_encoder_call.1} parent=5 // pred_check
        _
      $region10: #{_encoder_call.1} parent=5 // pred_check_branch
        %271 = sbr.rel (%p268) target = $region12
      $region11: #{_encoder_call.1} parent=5 // pred_region
        %s272 = ssub.s32 %s30, 1
        // Predicated region
        $region13: #{_encoder_call.1} parent=11 // pred_check
          %p273 = pneg %p126
        $region14: #{_encoder_call.1} parent=11 // pred_check_branch
          %275 = sbr.rel (%p273) target = $region16
        $region15: #{_encoder_call.1} parent=11 // pred_region
          %s276 = sld [smem:[#allocation3]]
          %278 = vsyncadd [#allocation8], 0
          %s279 = smul.addr %s276, 2
          %s280 = scalar_lea.hbm %s3, %s279
          %s282 = sshll.u32 %s280, 4
          %s283 = int_to_ptr.hbm [resolvable:$true] %s282
          %s284 = sshll.u32 [#allocation9], 4
          %s285 = int_to_ptr.vmem [resolvable:$true] %s284
          %287 = dma.hbm_to_vmem [thread:$0]  %s283, 32, %s285, [#allocation8]
        $region16: #{_encoder_call.1} parent=11 // pred_fallthru
          _
      $region12: #{_encoder_call.1} parent=5 // pred_fallthru
        _
      %p288 = scmp.lt.s32.totalorder %s30, 3
      // Predicated region
      $region17: #{_encoder_call.1} parent=5 // pred_check
        %p289 = pneg %p288
      $region18: #{_encoder_call.1} parent=5 // pred_check_branch
        %291 = sbr.rel (%p289) target = $region20
      $region19: #{_encoder_call.1} parent=5 // pred_region
        // Predicated region
        $region21: #{_encoder_call.1} parent=19 // pred_check
          %p292 = pneg %p64
        $region22: #{_encoder_call.1} parent=19 // pred_check_branch
          %294 = sbr.rel (%p292) target = $region24
        $region23: #{_encoder_call.1} parent=19 // pred_region
          %s295 = sand.u32 %s54, 1
          %s296 = scalar_lea.sflag [#allocation5], %s295
          %s297 = sand.u32 %s54, 1
          %s298 = smul.addr %s297, 4
          %s299 = scalar_lea.vmem [#allocation4], %s298
          %301 = vsyncadd %s296, 0
          %s302 = smul.addr %s37, 3
          %s303 = sadd.s32 %s38, %s302
          %s304 = smul.addr %s303, 4
          %s305 = scalar_lea.hbm %s1, %s304
          %s307 = sshll.u32 %s305, 4
          %s308 = int_to_ptr.hbm [resolvable:$true] %s307
          %s309 = sshll.u32 %s299, 4
          %s310 = int_to_ptr.vmem [resolvable:$true] %s309
          %312 = dma.hbm_to_vmem [thread:$0]  %s308, 64, %s310, %s296
        $region24: #{_encoder_call.1} parent=19 // pred_fallthru
          _
        // Predicated region
        $region25: #{_encoder_call.1} parent=19 // pred_check
          %p313 = pneg %p92
        $region26: #{_encoder_call.1} parent=19 // pred_check_branch
          %315 = sbr.rel (%p313) target = $region28
        $region27: #{_encoder_call.1} parent=19 // pred_region
          %s316 = sand.u32 %s30, 1
          %s317 = scalar_lea.sflag [#allocation8], %s316
          %s318 = sand.u32 %s82, 1
          %s319 = smul.addr %s318, 16
          %s320 = scalar_lea.vmem [#allocation7], %s319
          %s321 = smul.u32 2, %s38
          %323 = vsyncadd %s317, 0
          %s324 = smul.addr %s37, 6
          %s325 = sadd.s32 %s321, %s324
          %s326 = smul.addr %s325, 8
          %s327 = scalar_lea.hbm %s2, %s326
          %s329 = sshll.u32 %s327, 4
          %s330 = int_to_ptr.hbm [resolvable:$true] %s329
          %s331 = sshll.u32 %s320, 4
          %s332 = int_to_ptr.vmem [resolvable:$true] %s331
          %334 = dma.hbm_to_vmem [thread:$0]  %s330, 256, %s332, %s317
        $region28: #{_encoder_call.1} parent=19 // pred_fallthru
          _
        // Predicated region
        $region29: #{_encoder_call.1} parent=19 // pred_check
          %p335 = pneg %p146
        $region30: #{_encoder_call.1} parent=19 // pred_check_branch
          %337 = sbr.rel (%p335) target = $region32
        $region31: #{_encoder_call.1} parent=19 // pred_region
          %s338 = sand.u32 %s30, 1
          %s339 = scalar_lea.sflag [#allocation11], %s338
          %s340 = sand.u32 %s136, 1
          %s341 = smul.addr %s340, 256
          %s342 = scalar_lea.vmem [#allocation10], %s341
          %s343 = smul.u32 4, %s38
          %345 = vsyncadd %s339, 0
          %s346 = smul.addr %s343, 4
          %s347 = scalar_lea.hbm %s4, %s346
          %s348 = sshll.u32 %s347, 4
          %s349 = int_to_ptr.hbm [resolvable:$true] %s348
          %s350 = sshll.u32 %s342, 4
          %s351 = int_to_ptr.vmem [resolvable:$true] %s350
          %356 = dma.hbm_to_vmem [thread:$0]  %s349, 4096, %s351, %s339, 768, 256, 16
        $region32: #{_encoder_call.1} parent=19 // pred_fallthru
          _
        // Predicated region
        $region33: #{_encoder_call.1} parent=19 // pred_check
          %p357 = pneg %p172
        $region34: #{_encoder_call.1} parent=19 // pred_check_branch
          %359 = sbr.rel (%p357) target = $region36
        $region35: #{_encoder_call.1} parent=19 // pred_region
          %s360 = sand.u32 %s30, 1
          %s361 = scalar_lea.sflag [#allocation11], %s360
          %s362 = sand.u32 %s162, 1
          %s363 = smul.addr %s362, 4
          %s364 = scalar_lea.vmem [#allocation12], %s363
          %s365 = smul.u32 4, %s38
          %367 = vsyncadd %s361, 0
          %s368 = scalar_lea.hbm %s5, %s365
          %s370 = sshll.u32 %s368, 4
          %s371 = int_to_ptr.hbm [resolvable:$true] %s370
          %s372 = sshll.u32 %s364, 4
          %s373 = int_to_ptr.vmem [resolvable:$true] %s372
          %375 = dma.hbm_to_vmem [thread:$0]  %s371, 64, %s373, %s361
        $region36: #{_encoder_call.1} parent=19 // pred_fallthru
          _
        // Predicated region
        $region37: #{_encoder_call.1} parent=19 // pred_check
          %p376 = pneg %p198
        $region38: #{_encoder_call.1} parent=19 // pred_check_branch
          %378 = sbr.rel (%p376) target = $region40
        $region39: #{_encoder_call.1} parent=19 // pred_region
          %s379 = sand.u32 %s30, 1
          %s380 = scalar_lea.sflag [#allocation14], %s379
          %s381 = sand.u32 %s188, 1
          %s382 = smul.addr %s381, 512
          %s383 = scalar_lea.vmem [#allocation13], %s382
          %s384 = smul.u32 2, %s38
          %386 = vsyncadd %s380, 0
          %s387 = smul.addr %s384, 4
          %s388 = scalar_lea.hbm %s6, %s387
          %s389 = sshll.u32 %s388, 4
          %s390 = int_to_ptr.hbm [resolvable:$true] %s389
          %s391 = sshll.u32 %s383, 4
          %s392 = int_to_ptr.vmem [resolvable:$true] %s391
          %397 = dma.hbm_to_vmem [thread:$0]  %s390, 8192, %s392, %s380, 384, 128, 8
        $region40: #{_encoder_call.1} parent=19 // pred_fallthru
          _
        // Predicated region
        $region41: #{_encoder_call.1} parent=19 // pred_check
          %p398 = pneg %p224
        $region42: #{_encoder_call.1} parent=19 // pred_check_branch
          %400 = sbr.rel (%p398) target = $region44
        $region43: #{_encoder_call.1} parent=19 // pred_region
          %s401 = sand.u32 %s30, 1
          %s402 = scalar_lea.sflag [#allocation14], %s401
          %s403 = sand.u32 %s214, 1
          %s404 = smul.addr %s403, 2
          %s405 = scalar_lea.vmem [#allocation15], %s404
          %s406 = smul.u32 2, %s38
          %408 = vsyncadd %s402, 0
          %s409 = scalar_lea.hbm %s7, %s406
          %s411 = sshll.u32 %s409, 4
          %s412 = int_to_ptr.hbm [resolvable:$true] %s411
          %s413 = sshll.u32 %s405, 4
          %s414 = int_to_ptr.vmem [resolvable:$true] %s413
          %416 = dma.hbm_to_vmem [thread:$0]  %s412, 32, %s414, %s402
        $region44: #{_encoder_call.1} parent=19 // pred_fallthru
          _
      $region20: #{_encoder_call.1} parent=5 // pred_fallthru
        _
      %p417 = scmp.le.s32.totalorder 1, %s30
      %p418 = scmp.lt.s32.totalorder %s30, 4
      %p419 = pnand %p417, %p418
      %p420 = pneg %p419
      // Predicated region
      $region45: #{_encoder_call.1} parent=5 // pred_check
        _
      $region46: #{_encoder_call.1} parent=5 // pred_check_branch
        %422 = sbr.rel (%p419) target = $region48
      $region47: #{_encoder_call.1} parent=5 // pred_region
        %s423 = ssub.s32 %s30, 1
        %s424 = sand.u32 %s57, 1
        %s425 = scalar_lea.sflag [#allocation5], %s424
        %s426 = sand.u32 %s57, 1
        %s427 = smul.addr %s426, 4
        %s428 = scalar_lea.vmem [#allocation4], %s427
        // Predicated region
        $region49: #{_encoder_call.1} parent=47 // pred_check
          %p429 = pneg %p70
        $region50: #{_encoder_call.1} parent=47 // pred_check_branch
          %431 = sbr.rel (%p429) target = $region52
        $region51: #{_encoder_call.1} parent=47 // pred_region
          %433 = dma.done %s425, 64
        $region52: #{_encoder_call.1} parent=47 // pred_fallthru
          _
        %s434 = sand.u32 %s35, 1
        %s435 = scalar_lea.sflag [#allocation8], %s434
        %s436 = sand.u32 %s85, 1
        %s437 = smul.addr %s436, 16
        %s438 = scalar_lea.vmem [#allocation7], %s437
        // Predicated region
        $region53: #{_encoder_call.1} parent=47 // pred_check
          %p439 = pneg %p98
        $region54: #{_encoder_call.1} parent=47 // pred_check_branch
          %441 = sbr.rel (%p439) target = $region56
        $region55: #{_encoder_call.1} parent=47 // pred_region
          %443 = dma.done %s435, 256
        $region56: #{_encoder_call.1} parent=47 // pred_fallthru
          _
        // Predicated region
        $region57: #{_encoder_call.1} parent=47 // pred_check
          %p444 = pneg %p126
        $region58: #{_encoder_call.1} parent=47 // pred_check_branch
          %446 = sbr.rel (%p444) target = $region60
        $region59: #{_encoder_call.1} parent=47 // pred_region
          %448 = dma.done [#allocation8], 32
        $region60: #{_encoder_call.1} parent=47 // pred_fallthru
          _
        %s449 = sand.u32 %s35, 1
        %s450 = scalar_lea.sflag [#allocation11], %s449
        %s451 = sand.u32 %s139, 1
        %s452 = smul.addr %s451, 256
        %s453 = scalar_lea.vmem [#allocation10], %s452
        // Predicated region
        $region61: #{_encoder_call.1} parent=47 // pred_check
          %p454 = pneg %p152
        $region62: #{_encoder_call.1} parent=47 // pred_check_branch
          %456 = sbr.rel (%p454) target = $region64
        $region63: #{_encoder_call.1} parent=47 // pred_region
          %458 = dma.done %s450, 4096
        $region64: #{_encoder_call.1} parent=47 // pred_fallthru
          _
        %s459 = sand.u32 %s35, 1
        %s460 = scalar_lea.sflag [#allocation11], %s459
        %s461 = sand.u32 %s165, 1
        %s462 = smul.addr %s461, 4
        %s463 = scalar_lea.vmem [#allocation12], %s462
        // Predicated region
        $region65: #{_encoder_call.1} parent=47 // pred_check
          %p464 = pneg %p178
        $region66: #{_encoder_call.1} parent=47 // pred_check_branch
          %466 = sbr.rel (%p464) target = $region68
        $region67: #{_encoder_call.1} parent=47 // pred_region
          %468 = dma.done %s460, 64
        $region68: #{_encoder_call.1} parent=47 // pred_fallthru
          _
        %s469 = sand.u32 %s35, 1
        %s470 = scalar_lea.sflag [#allocation14], %s469
        %s471 = sand.u32 %s191, 1
        %s472 = smul.addr %s471, 512
        %s473 = scalar_lea.vmem [#allocation13], %s472
        // Predicated region
        $region69: #{_encoder_call.1} parent=47 // pred_check
          %p474 = pneg %p204
        $region70: #{_encoder_call.1} parent=47 // pred_check_branch
          %476 = sbr.rel (%p474) target = $region72
        $region71: #{_encoder_call.1} parent=47 // pred_region
          %478 = dma.done %s470, 8192
        $region72: #{_encoder_call.1} parent=47 // pred_fallthru
          _
        %s479 = sand.u32 %s35, 1
        %s480 = scalar_lea.sflag [#allocation14], %s479
        %s481 = sand.u32 %s217, 1
        %s482 = smul.addr %s481, 2
        %s483 = scalar_lea.vmem [#allocation15], %s482
        // Predicated region
        $region73: #{_encoder_call.1} parent=47 // pred_check
          %p484 = pneg %p230
        $region74: #{_encoder_call.1} parent=47 // pred_check_branch
          %486 = sbr.rel (%p484) target = $region76
        $region75: #{_encoder_call.1} parent=47 // pred_region
          %488 = dma.done %s480, 32
        $region76: #{_encoder_call.1} parent=47 // pred_fallthru
          _
        %s489 = sand.u32 %s57, 1
        %s490 = scalar_lea.sflag [#allocation5], %s489
        %s491 = sand.u32 %s57, 1
        %s492 = smul.addr %s491, 4
        %s493 = scalar_lea.vmem [#allocation4], %s492
        %p494 = pneg %p70
        %p495 = pneg %p67
        %s496 = sand.u32 %s35, 1
        %s497 = scalar_lea.sflag [#allocation8], %s496
        %s498 = sand.u32 %s85, 1
        %s499 = smul.addr %s498, 16
        %s500 = scalar_lea.vmem [#allocation7], %s499
        %p501 = pneg %p98
        %p502 = pneg %p95
        %p503 = pneg %p126
        %p504 = pneg %p123
        %s505 = sand.u32 %s35, 1
        %s506 = scalar_lea.sflag [#allocation11], %s505
        %s507 = sand.u32 %s139, 1
        %s508 = smul.addr %s507, 256
        %s509 = scalar_lea.vmem [#allocation10], %s508
        %p510 = pneg %p152
        %p511 = pneg %p149
        %s512 = sand.u32 %s35, 1
        %s513 = scalar_lea.sflag [#allocation11], %s512
        %s514 = sand.u32 %s165, 1
        %s515 = smul.addr %s514, 4
        %s516 = scalar_lea.vmem [#allocation12], %s515
        %p517 = pneg %p178
        %p518 = pneg %p175
        %s519 = sand.u32 %s35, 1
        %s520 = scalar_lea.sflag [#allocation14], %s519
        %s521 = sand.u32 %s191, 1
        %s522 = smul.addr %s521, 512
        %s523 = scalar_lea.vmem [#allocation13], %s522
        %p524 = pneg %p204
        %p525 = pneg %p201
        %s526 = sand.u32 %s35, 1
        %s527 = scalar_lea.sflag [#allocation14], %s526
        %s528 = sand.u32 %s217, 1
        %s529 = smul.addr %s528, 2
        %s530 = scalar_lea.vmem [#allocation15], %s529
        %p531 = pneg %p230
        %p532 = pneg %p227
        %p533 = pneg %p258
        %p534 = pneg %p255
        %s535 = sand.u32 %s245, 1
        %s536 = scalar_lea.sflag [#allocation6], %s535
        %s537 = sand.u32 %s245, 1
        %s538 = smul.addr %s537, 16
        %s539 = scalar_lea.vmem [#allocation16], %s538
        %s540 = smul.u32 2, %s40
        %s541 = sld [smem:[#allocation3]]
        %s542 = smul.u32 4, %s40
        %s543 = smul.u32 4, %s40
        %s544 = smul.u32 2, %s40
        %s545 = smul.u32 2, %s40
        %s546 = smul.u32 2, %s40
        %v547 = vld [vmem:[#allocation9] sm:$0x3]
        %v548 = vld [vmem:[%s428] sm:$0xf]
        %v549 = vld [vmem:[%s453] sm:$0xff]
        %v550 = vld [vmem:[%s453 + $0x8] sm:$0xff]
        %v551 = vld [vmem:[%s453 + $0x10] sm:$0xff]
        %v552 = vld [vmem:[%s453 + $0x18] sm:$0xff]
        %v553 = vld [vmem:[%s453 + $0x20] sm:$0xff]
        %v554 = vld [vmem:[%s453 + $0x28] sm:$0xff]
        %v555 = vld [vmem:[%s453 + $0x30] sm:$0xff]
        %v556 = vld [vmem:[%s453 + $0x38] sm:$0xff]
        %v557 = vld [vmem:[%s453 + $0x40] sm:$0xff]
        %v558 = vld [vmem:[%s453 + $0x48] sm:$0xff]
        %v559 = vld [vmem:[%s453 + $0x50] sm:$0xff]
        %v560 = vld [vmem:[%s453 + $0x58] sm:$0xff]
        %v561 = vld [vmem:[%s453 + $0x60] sm:$0xff]
        %v562 = vld [vmem:[%s453 + $0x68] sm:$0xff]
        %v563 = vld [vmem:[%s453 + $0x70] sm:$0xff]
        %v564 = vld [vmem:[%s453 + $0x78] sm:$0xff]
        %v565 = vld [vmem:[%s453 + $0x80] sm:$0xff]
        %v566 = vld [vmem:[%s453 + $0x88] sm:$0xff]
        %v567 = vld [vmem:[%s453 + $0x90] sm:$0xff]
        %v568 = vld [vmem:[%s453 + $0x98] sm:$0xff]
        %v569 = vld [vmem:[%s453 + $0xa0] sm:$0xff]
        %v570 = vld [vmem:[%s453 + $0xa8] sm:$0xff]
        %v571 = vld [vmem:[%s453 + $0xb0] sm:$0xff]
        %v572 = vld [vmem:[%s453 + $0xb8] sm:$0xff]
        %v573 = vld [vmem:[%s453 + $0xc0] sm:$0xff]
        %v574 = vld [vmem:[%s453 + $0xc8] sm:$0xff]
        %v575 = vld [vmem:[%s453 + $0xd0] sm:$0xff]
        %v576 = vld [vmem:[%s453 + $0xd8] sm:$0xff]
        %v577 = vld [vmem:[%s453 + $0xe0] sm:$0xff]
        %v578 = vld [vmem:[%s453 + $0xe8] sm:$0xff]
        %v579 = vld [vmem:[%s453 + $0xf0] sm:$0xff]
        %v580 = vld [vmem:[%s453 + $0xf8] sm:$0xff]
        %v581 = vld [vmem:[%s463] sm:$0xf]
        %v583 = vperm.slane %v581, 0
        %v584 = vperm.slane %v581, 1
        %v585 = vperm.slane %v581, 2
        %v586 = vperm.slane %v581, 3
        %v623 = vunpack.c.l.b16 %v549
        %v624 = vunpack.c.h.b16 %v549
        %v625 = vunpack.c.l.b16 %v550
        %v626 = vunpack.c.h.b16 %v550
        %v627 = vunpack.c.l.b16 %v551
        %v628 = vunpack.c.h.b16 %v551
        %v629 = vunpack.c.l.b16 %v552
        %v630 = vunpack.c.h.b16 %v552
        %v631 = vunpack.c.l.b16 %v553
        %v632 = vunpack.c.h.b16 %v553
        %v633 = vunpack.c.l.b16 %v554
        %v634 = vunpack.c.h.b16 %v554
        %v635 = vunpack.c.l.b16 %v555
        %v636 = vunpack.c.h.b16 %v555
        %v637 = vunpack.c.l.b16 %v556
        %v638 = vunpack.c.h.b16 %v556
        %v639 = vunpack.c.l.b16 %v557
        %v640 = vunpack.c.h.b16 %v557
        %v641 = vunpack.c.l.b16 %v558
        %v642 = vunpack.c.h.b16 %v558
        %v643 = vunpack.c.l.b16 %v559
        %v644 = vunpack.c.h.b16 %v559
        %v645 = vunpack.c.l.b16 %v560
        %v646 = vunpack.c.h.b16 %v560
        %v647 = vunpack.c.l.b16 %v561
        %v648 = vunpack.c.h.b16 %v561
        %v649 = vunpack.c.l.b16 %v562
        %v650 = vunpack.c.h.b16 %v562
        %v651 = vunpack.c.l.b16 %v563
        %v652 = vunpack.c.h.b16 %v563
        %v653 = vunpack.c.l.b16 %v564
        %v654 = vunpack.c.h.b16 %v564
        %v655 = vunpack.c.l.b16 %v565
        %v656 = vunpack.c.h.b16 %v565
        %v657 = vunpack.c.l.b16 %v566
        %v658 = vunpack.c.h.b16 %v566
        %v659 = vunpack.c.l.b16 %v567
        %v660 = vunpack.c.h.b16 %v567
        %v661 = vunpack.c.l.b16 %v568
        %v662 = vunpack.c.h.b16 %v568
        %v663 = vunpack.c.l.b16 %v569
        %v664 = vunpack.c.h.b16 %v569
        %v665 = vunpack.c.l.b16 %v570
        %v666 = vunpack.c.h.b16 %v570
        %v667 = vunpack.c.l.b16 %v571
        %v668 = vunpack.c.h.b16 %v571
        %v669 = vunpack.c.l.b16 %v572
        %v670 = vunpack.c.h.b16 %v572
        %v671 = vunpack.c.l.b16 %v573
        %v672 = vunpack.c.h.b16 %v573
        %v673 = vunpack.c.l.b16 %v574
        %v674 = vunpack.c.h.b16 %v574
        %v675 = vunpack.c.l.b16 %v575
        %v676 = vunpack.c.h.b16 %v575
        %v677 = vunpack.c.l.b16 %v576
        %v678 = vunpack.c.h.b16 %v576
        %v679 = vunpack.c.l.b16 %v577
        %v680 = vunpack.c.h.b16 %v577
        %v681 = vunpack.c.l.b16 %v578
        %v682 = vunpack.c.h.b16 %v578
        %v683 = vunpack.c.l.b16 %v579
        %v684 = vunpack.c.h.b16 %v579
        %v685 = vunpack.c.l.b16 %v580
        %v686 = vunpack.c.h.b16 %v580
        %v687 = vpack.c.b16 %v627, %v623
        %v688 = vpack.c.b16 %v628, %v624
        %v689 = vpack.c.b16 %v629, %v625
        %v690 = vpack.c.b16 %v630, %v626
        %v691 = vpack.c.b16 %v635, %v631
        %v692 = vpack.c.b16 %v636, %v632
        %v693 = vpack.c.b16 %v637, %v633
        %v694 = vpack.c.b16 %v638, %v634
        %v695 = vpack.c.b16 %v643, %v639
        %v696 = vpack.c.b16 %v644, %v640
        %v697 = vpack.c.b16 %v645, %v641
        %v698 = vpack.c.b16 %v646, %v642
        %v699 = vpack.c.b16 %v651, %v647
        %v700 = vpack.c.b16 %v652, %v648
        %v701 = vpack.c.b16 %v653, %v649
        %v702 = vpack.c.b16 %v654, %v650
        %v703 = vpack.c.b16 %v659, %v655
        %v704 = vpack.c.b16 %v660, %v656
        %v705 = vpack.c.b16 %v661, %v657
        %v706 = vpack.c.b16 %v662, %v658
        %v707 = vpack.c.b16 %v667, %v663
        %v708 = vpack.c.b16 %v668, %v664
        %v709 = vpack.c.b16 %v669, %v665
        %v710 = vpack.c.b16 %v670, %v666
        %v711 = vpack.c.b16 %v675, %v671
        %v712 = vpack.c.b16 %v676, %v672
        %v713 = vpack.c.b16 %v677, %v673
        %v714 = vpack.c.b16 %v678, %v674
        %v715 = vpack.c.b16 %v683, %v679
        %v716 = vpack.c.b16 %v684, %v680
        %v717 = vpack.c.b16 %v685, %v681
        %v718 = vpack.c.b16 %v686, %v682
        %751 = vmatpush.bf16.msra.mxu0 %v715
        %752 = vmatpush.bf16.msra.mxu0 %v711
        %753 = vmatpush.bf16.msra.mxu0 %v707
        %754 = vmatpush.bf16.msra.mxu0 %v703
        %755 = vmatpush.bf16.msra.mxu0 %v699
        %756 = vmatpush.bf16.msra.mxu0 %v695
        %757 = vmatpush.bf16.msra.mxu0 %v691
        %758 = vmatpush.bf16.msra.mxu0 %v687
        %759 = vmatmul.bf16.gmra.mxu0 %v548
        %v760 = vpop.f32.mrf.mxu0
        %v761 = vadd.f32 %v583, %v760
        %v762 = vpop.f32.mrf.mxu0
        %763 = vdwg.mxu0
        %764 = vmatpush.bf16.msra.mxu0 %v716
        %765 = vmatpush.bf16.msra.mxu0 %v712
        %766 = vmatpush.bf16.msra.mxu0 %v708
        %767 = vmatpush.bf16.msra.mxu0 %v704
        %768 = vmatpush.bf16.msra.mxu0 %v700
        %769 = vmatpush.bf16.msra.mxu0 %v696
        %770 = vmatpush.bf16.msra.mxu0 %v692
        %771 = vmatpush.bf16.msra.mxu0 %v688
        %772 = vmatmul.bf16.gmra.mxu0 %v548
        %v773 = vpop.f32.mrf.mxu0
        %v774 = vadd.f32 %v584, %v773
        %v775 = vpop.f32.mrf.mxu0
        %776 = vdwg.mxu0
        %777 = vmatpush.bf16.msra.mxu0 %v717
        %778 = vmatpush.bf16.msra.mxu0 %v713
        %779 = vmatpush.bf16.msra.mxu0 %v709
        %780 = vmatpush.bf16.msra.mxu0 %v705
        %781 = vmatpush.bf16.msra.mxu0 %v701
        %782 = vmatpush.bf16.msra.mxu0 %v697
        %783 = vmatpush.bf16.msra.mxu0 %v693
        %784 = vmatpush.bf16.msra.mxu0 %v689
        %785 = vmatmul.bf16.gmra.mxu0 %v548
        %v786 = vpop.f32.mrf.mxu0
        %v787 = vadd.f32 %v585, %v786
        %v788 = vpop.f32.mrf.mxu0
        %789 = vdwg.mxu0
        %790 = vmatpush.bf16.msra.mxu0 %v718
        %791 = vmatpush.bf16.msra.mxu0 %v714
        %792 = vmatpush.bf16.msra.mxu0 %v710
        %793 = vmatpush.bf16.msra.mxu0 %v706
        %794 = vmatpush.bf16.msra.mxu0 %v702
        %795 = vmatpush.bf16.msra.mxu0 %v698
        %796 = vmatpush.bf16.msra.mxu0 %v694
        %797 = vmatpush.bf16.msra.mxu0 %v690
        %798 = vmatmul.bf16.gmra.mxu0 %v548
        %v799 = vpop.f32.mrf.mxu0
        %v800 = vadd.f32 %v586, %v799
        %v801 = vpop.f32.mrf.mxu0
        %802 = vdwg.mxu0
        %v803 = vadd.f32 %v761, 1.0
        %v804 = vadd.f32 %v774, 1.0
        %v805 = vadd.f32 %v787, 1.0
        %v806 = vadd.f32 %v800, 1.0
        %v807 = vmul.f32 %v803, 0.1
        %v808 = vmul.f32 %v804, 0.1
        %v809 = vmul.f32 %v805, 0.1
        %v810 = vmul.f32 %v806, 0.1
        %v811 = vsub.f32 %v807, 1.0
        %v812 = vsub.f32 %v808, 1.0
        %v813 = vsub.f32 %v809, 1.0
        %v814 = vsub.f32 %v810, 1.0
        %v815 = vsub.f32 %v761, 1.0
        %v816 = vsub.f32 %v774, 1.0
        %v817 = vsub.f32 %v787, 1.0
        %v818 = vsub.f32 %v800, 1.0
        %v819 = vmul.f32 %v815, 0.1
        %v820 = vmul.f32 %v816, 0.1
        %v821 = vmul.f32 %v817, 0.1
        %v822 = vmul.f32 %v818, 0.1
        %v823 = vadd.f32 %v819, 1.0
        %v824 = vadd.f32 %v820, 1.0
        %v825 = vadd.f32 %v821, 1.0
        %v826 = vadd.f32 %v822, 1.0
        %v827 = vmin.f32 %v761, %v823
        %v828 = vmin.f32 %v774, %v824
        %v829 = vmin.f32 %v787, %v825
        %v830 = vmin.f32 %v800, %v826
        %v831 = vmax.f32 %v811, %v827
        %v832 = vmax.f32 %v812, %v828
        %v833 = vmax.f32 %v813, %v829
        %v834 = vmax.f32 %v814, %v830
        %v835 = vpack.c.bf16 %v831, %v831
        %v836 = vpack.c.bf16 %v832, %v832
        %v837 = vpack.c.bf16 %v833, %v833
        %v838 = vpack.c.bf16 %v834, %v834
        %v839 = vld [vmem:[%s473] sm:$0xff]
        %v840 = vld [vmem:[%s473 + $0x8] sm:$0xff]
        %v841 = vld [vmem:[%s473 + $0x10] sm:$0xff]
        %v842 = vld [vmem:[%s473 + $0x18] sm:$0xff]
        %v843 = vld [vmem:[%s473 + $0x20] sm:$0xff]
        %v844 = vld [vmem:[%s473 + $0x28] sm:$0xff]
        %v845 = vld [vmem:[%s473 + $0x30] sm:$0xff]
        %v846 = vld [vmem:[%s473 + $0x38] sm:$0xff]
        %v847 = vld [vmem:[%s473 + $0x40] sm:$0xff]
        %v848 = vld [vmem:[%s473 + $0x48] sm:$0xff]
        %v849 = vld [vmem:[%s473 + $0x50] sm:$0xff]
        %v850 = vld [vmem:[%s473 + $0x58] sm:$0xff]
        %v851 = vld [vmem:[%s473 + $0x60] sm:$0xff]
        %v852 = vld [vmem:[%s473 + $0x68] sm:$0xff]
        %v853 = vld [vmem:[%s473 + $0x70] sm:$0xff]
        %v854 = vld [vmem:[%s473 + $0x78] sm:$0xff]
        %v855 = vld [vmem:[%s473 + $0x80] sm:$0xff]
        %v856 = vld [vmem:[%s473 + $0x88] sm:$0xff]
        %v857 = vld [vmem:[%s473 + $0x90] sm:$0xff]
        %v858 = vld [vmem:[%s473 + $0x98] sm:$0xff]
        %v859 = vld [vmem:[%s473 + $0xa0] sm:$0xff]
        %v860 = vld [vmem:[%s473 + $0xa8] sm:$0xff]
        %v861 = vld [vmem:[%s473 + $0xb0] sm:$0xff]
        %v862 = vld [vmem:[%s473 + $0xb8] sm:$0xff]
        %v863 = vld [vmem:[%s473 + $0xc0] sm:$0xff]
        %v864 = vld [vmem:[%s473 + $0xc8] sm:$0xff]
        %v865 = vld [vmem:[%s473 + $0xd0] sm:$0xff]
        %v866 = vld [vmem:[%s473 + $0xd8] sm:$0xff]
        %v867 = vld [vmem:[%s473 + $0xe0] sm:$0xff]
        %v868 = vld [vmem:[%s473 + $0xe8] sm:$0xff]
        %v869 = vld [vmem:[%s473 + $0xf0] sm:$0xff]
        %v870 = vld [vmem:[%s473 + $0xf8] sm:$0xff]
        %v871 = vld [vmem:[%s473 + $0x100] sm:$0xff]
        %v872 = vld [vmem:[%s473 + $0x108] sm:$0xff]
        %v873 = vld [vmem:[%s473 + $0x110] sm:$0xff]
        %v874 = vld [vmem:[%s473 + $0x118] sm:$0xff]
        %v875 = vld [vmem:[%s473 + $0x120] sm:$0xff]
        %v876 = vld [vmem:[%s473 + $0x128] sm:$0xff]
        %v877 = vld [vmem:[%s473 + $0x130] sm:$0xff]
        %v878 = vld [vmem:[%s473 + $0x138] sm:$0xff]
        %v879 = vld [vmem:[%s473 + $0x140] sm:$0xff]
        %v880 = vld [vmem:[%s473 + $0x148] sm:$0xff]
        %v881 = vld [vmem:[%s473 + $0x150] sm:$0xff]
        %v882 = vld [vmem:[%s473 + $0x158] sm:$0xff]
        %v883 = vld [vmem:[%s473 + $0x160] sm:$0xff]
        %v884 = vld [vmem:[%s473 + $0x168] sm:$0xff]
        %v885 = vld [vmem:[%s473 + $0x170] sm:$0xff]
        %v886 = vld [vmem:[%s473 + $0x178] sm:$0xff]
        %v887 = vld [vmem:[%s473 + $0x180] sm:$0xff]
        %v888 = vld [vmem:[%s473 + $0x188] sm:$0xff]
        %v889 = vld [vmem:[%s473 + $0x190] sm:$0xff]
        %v890 = vld [vmem:[%s473 + $0x198] sm:$0xff]
        %v891 = vld [vmem:[%s473 + $0x1a0] sm:$0xff]
        %v892 = vld [vmem:[%s473 + $0x1a8] sm:$0xff]
        %v893 = vld [vmem:[%s473 + $0x1b0] sm:$0xff]
        %v894 = vld [vmem:[%s473 + $0x1b8] sm:$0xff]
        %v895 = vld [vmem:[%s473 + $0x1c0] sm:$0xff]
        %v896 = vld [vmem:[%s473 + $0x1c8] sm:$0xff]
        %v897 = vld [vmem:[%s473 + $0x1d0] sm:$0xff]
        %v898 = vld [vmem:[%s473 + $0x1d8] sm:$0xff]
        %v899 = vld [vmem:[%s473 + $0x1e0] sm:$0xff]
        %v900 = vld [vmem:[%s473 + $0x1e8] sm:$0xff]
        %v901 = vld [vmem:[%s473 + $0x1f0] sm:$0xff]
        %v902 = vld [vmem:[%s473 + $0x1f8] sm:$0xff]
        %v903 = vld [vmem:[%s483] sm:$0x3]
        %v905 = vperm.slane %v903, 0
        %v906 = vperm.slane %v903, 1
        %v973 = vunpack.c.l.b16 %v839
        %v974 = vunpack.c.h.b16 %v839
        %v975 = vunpack.c.l.b16 %v840
        %v976 = vunpack.c.h.b16 %v840
        %v977 = vunpack.c.l.b16 %v841
        %v978 = vunpack.c.h.b16 %v841
        %v979 = vunpack.c.l.b16 %v842
        %v980 = vunpack.c.h.b16 %v842
        %v981 = vunpack.c.l.b16 %v843
        %v982 = vunpack.c.h.b16 %v843
        %v983 = vunpack.c.l.b16 %v844
        %v984 = vunpack.c.h.b16 %v844
        %v985 = vunpack.c.l.b16 %v845
        %v986 = vunpack.c.h.b16 %v845
        %v987 = vunpack.c.l.b16 %v846
        %v988 = vunpack.c.h.b16 %v846
        %v989 = vunpack.c.l.b16 %v847
        %v990 = vunpack.c.h.b16 %v847
        %v991 = vunpack.c.l.b16 %v848
        %v992 = vunpack.c.h.b16 %v848
        %v993 = vunpack.c.l.b16 %v849
        %v994 = vunpack.c.h.b16 %v849
        %v995 = vunpack.c.l.b16 %v850
        %v996 = vunpack.c.h.b16 %v850
        %v997 = vunpack.c.l.b16 %v851
        %v998 = vunpack.c.h.b16 %v851
        %v999 = vunpack.c.l.b16 %v852
        %v1000 = vunpack.c.h.b16 %v852
        %v1001 = vunpack.c.l.b16 %v853
        %v1002 = vunpack.c.h.b16 %v853
        %v1003 = vunpack.c.l.b16 %v854
        %v1004 = vunpack.c.h.b16 %v854
        %v1005 = vunpack.c.l.b16 %v855
        %v1006 = vunpack.c.h.b16 %v855
        %v1007 = vunpack.c.l.b16 %v856
        %v1008 = vunpack.c.h.b16 %v856
        %v1009 = vunpack.c.l.b16 %v857
        %v1010 = vunpack.c.h.b16 %v857
        %v1011 = vunpack.c.l.b16 %v858
        %v1012 = vunpack.c.h.b16 %v858
        %v1013 = vunpack.c.l.b16 %v859
        %v1014 = vunpack.c.h.b16 %v859
        %v1015 = vunpack.c.l.b16 %v860
        %v1016 = vunpack.c.h.b16 %v860
        %v1017 = vunpack.c.l.b16 %v861
        %v1018 = vunpack.c.h.b16 %v861
        %v1019 = vunpack.c.l.b16 %v862
        %v1020 = vunpack.c.h.b16 %v862
        %v1021 = vunpack.c.l.b16 %v863
        %v1022 = vunpack.c.h.b16 %v863
        %v1023 = vunpack.c.l.b16 %v864
        %v1024 = vunpack.c.h.b16 %v864
        %v1025 = vunpack.c.l.b16 %v865
        %v1026 = vunpack.c.h.b16 %v865
        %v1027 = vunpack.c.l.b16 %v866
        %v1028 = vunpack.c.h.b16 %v866
        %v1029 = vunpack.c.l.b16 %v867
        %v1030 = vunpack.c.h.b16 %v867
        %v1031 = vunpack.c.l.b16 %v868
        %v1032 = vunpack.c.h.b16 %v868
        %v1033 = vunpack.c.l.b16 %v869
        %v1034 = vunpack.c.h.b16 %v869
        %v1035 = vunpack.c.l.b16 %v870
        %v1036 = vunpack.c.h.b16 %v870
        %v1037 = vunpack.c.l.b16 %v871
        %v1038 = vunpack.c.h.b16 %v871
        %v1039 = vunpack.c.l.b16 %v872
        %v1040 = vunpack.c.h.b16 %v872
        %v1041 = vunpack.c.l.b16 %v873
        %v1042 = vunpack.c.h.b16 %v873
        %v1043 = vunpack.c.l.b16 %v874
        %v1044 = vunpack.c.h.b16 %v874
        %v1045 = vunpack.c.l.b16 %v875
        %v1046 = vunpack.c.h.b16 %v875
        %v1047 = vunpack.c.l.b16 %v876
        %v1048 = vunpack.c.h.b16 %v876
        %v1049 = vunpack.c.l.b16 %v877
        %v1050 = vunpack.c.h.b16 %v877
        %v1051 = vunpack.c.l.b16 %v878
        %v1052 = vunpack.c.h.b16 %v878
        %v1053 = vunpack.c.l.b16 %v879
        %v1054 = vunpack.c.h.b16 %v879
        %v1055 = vunpack.c.l.b16 %v880
        %v1056 = vunpack.c.h.b16 %v880
        %v1057 = vunpack.c.l.b16 %v881
        %v1058 = vunpack.c.h.b16 %v881
        %v1059 = vunpack.c.l.b16 %v882
        %v1060 = vunpack.c.h.b16 %v882
        %v1061 = vunpack.c.l.b16 %v883
        %v1062 = vunpack.c.h.b16 %v883
        %v1063 = vunpack.c.l.b16 %v884
        %v1064 = vunpack.c.h.b16 %v884
        %v1065 = vunpack.c.l.b16 %v885
        %v1066 = vunpack.c.h.b16 %v885
        %v1067 = vunpack.c.l.b16 %v886
        %v1068 = vunpack.c.h.b16 %v886
        %v1069 = vunpack.c.l.b16 %v887
        %v1070 = vunpack.c.h.b16 %v887
        %v1071 = vunpack.c.l.b16 %v888
        %v1072 = vunpack.c.h.b16 %v888
        %v1073 = vunpack.c.l.b16 %v889
        %v1074 = vunpack.c.h.b16 %v889
        %v1075 = vunpack.c.l.b16 %v890
        %v1076 = vunpack.c.h.b16 %v890
        %v1077 = vunpack.c.l.b16 %v891
        %v1078 = vunpack.c.h.b16 %v891
        %v1079 = vunpack.c.l.b16 %v892
        %v1080 = vunpack.c.h.b16 %v892
        %v1081 = vunpack.c.l.b16 %v893
        %v1082 = vunpack.c.h.b16 %v893
        %v1083 = vunpack.c.l.b16 %v894
        %v1084 = vunpack.c.h.b16 %v894
        %v1085 = vunpack.c.l.b16 %v895
        %v1086 = vunpack.c.h.b16 %v895
        %v1087 = vunpack.c.l.b16 %v896
        %v1088 = vunpack.c.h.b16 %v896
        %v1089 = vunpack.c.l.b16 %v897
        %v1090 = vunpack.c.h.b16 %v897
        %v1091 = vunpack.c.l.b16 %v898
        %v1092 = vunpack.c.h.b16 %v898
        %v1093 = vunpack.c.l.b16 %v899
        %v1094 = vunpack.c.h.b16 %v899
        %v1095 = vunpack.c.l.b16 %v900
        %v1096 = vunpack.c.h.b16 %v900
        %v1097 = vunpack.c.l.b16 %v901
        %v1098 = vunpack.c.h.b16 %v901
        %v1099 = vunpack.c.l.b16 %v902
        %v1100 = vunpack.c.h.b16 %v902
        %v1101 = vpack.c.b16 %v975, %v973
        %v1102 = vpack.c.b16 %v976, %v974
        %v1103 = vpack.c.b16 %v979, %v977
        %v1104 = vpack.c.b16 %v980, %v978
        %v1105 = vpack.c.b16 %v983, %v981
        %v1106 = vpack.c.b16 %v984, %v982
        %v1107 = vpack.c.b16 %v987, %v985
        %v1108 = vpack.c.b16 %v988, %v986
        %v1109 = vpack.c.b16 %v991, %v989
        %v1110 = vpack.c.b16 %v992, %v990
        %v1111 = vpack.c.b16 %v995, %v993
        %v1112 = vpack.c.b16 %v996, %v994
        %v1113 = vpack.c.b16 %v999, %v997
        %v1114 = vpack.c.b16 %v1000, %v998
        %v1115 = vpack.c.b16 %v1003, %v1001
        %v1116 = vpack.c.b16 %v1004, %v1002
        %v1117 = vpack.c.b16 %v1007, %v1005
        %v1118 = vpack.c.b16 %v1008, %v1006
        %v1119 = vpack.c.b16 %v1011, %v1009
        %v1120 = vpack.c.b16 %v1012, %v1010
        %v1121 = vpack.c.b16 %v1015, %v1013
        %v1122 = vpack.c.b16 %v1016, %v1014
        %v1123 = vpack.c.b16 %v1019, %v1017
        %v1124 = vpack.c.b16 %v1020, %v1018
        %v1125 = vpack.c.b16 %v1023, %v1021
        %v1126 = vpack.c.b16 %v1024, %v1022
        %v1127 = vpack.c.b16 %v1027, %v1025
        %v1128 = vpack.c.b16 %v1028, %v1026
        %v1129 = vpack.c.b16 %v1031, %v1029
        %v1130 = vpack.c.b16 %v1032, %v1030
        %v1131 = vpack.c.b16 %v1035, %v1033
        %v1132 = vpack.c.b16 %v1036, %v1034
        %v1133 = vpack.c.b16 %v1039, %v1037
        %v1134 = vpack.c.b16 %v1040, %v1038
        %v1135 = vpack.c.b16 %v1043, %v1041
        %v1136 = vpack.c.b16 %v1044, %v1042
        %v1137 = vpack.c.b16 %v1047, %v1045
        %v1138 = vpack.c.b16 %v1048, %v1046
        %v1139 = vpack.c.b16 %v1051, %v1049
        %v1140 = vpack.c.b16 %v1052, %v1050
        %v1141 = vpack.c.b16 %v1055, %v1053
        %v1142 = vpack.c.b16 %v1056, %v1054
        %v1143 = vpack.c.b16 %v1059, %v1057
        %v1144 = vpack.c.b16 %v1060, %v1058
        %v1145 = vpack.c.b16 %v1063, %v1061
        %v1146 = vpack.c.b16 %v1064, %v1062
        %v1147 = vpack.c.b16 %v1067, %v1065
        %v1148 = vpack.c.b16 %v1068, %v1066
        %v1149 = vpack.c.b16 %v1071, %v1069
        %v1150 = vpack.c.b16 %v1072, %v1070
        %v1151 = vpack.c.b16 %v1075, %v1073
        %v1152 = vpack.c.b16 %v1076, %v1074
        %v1153 = vpack.c.b16 %v1079, %v1077
        %v1154 = vpack.c.b16 %v1080, %v1078
        %v1155 = vpack.c.b16 %v1083, %v1081
        %v1156 = vpack.c.b16 %v1084, %v1082
        %v1157 = vpack.c.b16 %v1087, %v1085
        %v1158 = vpack.c.b16 %v1088, %v1086
        %v1159 = vpack.c.b16 %v1091, %v1089
        %v1160 = vpack.c.b16 %v1092, %v1090
        %v1161 = vpack.c.b16 %v1095, %v1093
        %v1162 = vpack.c.b16 %v1096, %v1094
        %v1163 = vpack.c.b16 %v1099, %v1097
        %v1164 = vpack.c.b16 %v1100, %v1098
        %1229 = vmatpush.bf16.msra.mxu0 %v1115
        %1230 = vmatpush.bf16.msra.mxu0 %v1113
        %1231 = vmatpush.bf16.msra.mxu0 %v1111
        %1232 = vmatpush.bf16.msra.mxu0 %v1109
        %1233 = vmatpush.bf16.msra.mxu0 %v1107
        %1234 = vmatpush.bf16.msra.mxu0 %v1105
        %1235 = vmatpush.bf16.msra.mxu0 %v1103
        %1236 = vmatpush.bf16.msra.mxu0 %v1101
        %1237 = vmatmul.bf16.gmra.mxu0 %v835
        %v1238 = vpop.f32.mrf.mxu0
        %v1239 = vadd.f32 %v905, %v1238
        %v1240 = vpop.f32.mrf.mxu0
        %1241 = vdwg.mxu0
        %1242 = vmatpush.bf16.msra.mxu0 %v1131
        %1243 = vmatpush.bf16.msra.mxu0 %v1129
        %1244 = vmatpush.bf16.msra.mxu0 %v1127
        %1245 = vmatpush.bf16.msra.mxu0 %v1125
        %1246 = vmatpush.bf16.msra.mxu0 %v1123
        %1247 = vmatpush.bf16.msra.mxu0 %v1121
        %1248 = vmatpush.bf16.msra.mxu0 %v1119
        %1249 = vmatpush.bf16.msra.mxu0 %v1117
        %1250 = vmatmul.bf16.gmra.mxu0 %v836
        %v1251 = vpop.f32.mrf.mxu0
        %v1252 = vadd.f32 %v1239, %v1251
        %v1253 = vpop.f32.mrf.mxu0
        %1254 = vdwg.mxu0
        %1255 = vmatpush.bf16.msra.mxu0 %v1147
        %1256 = vmatpush.bf16.msra.mxu0 %v1145
        %1257 = vmatpush.bf16.msra.mxu0 %v1143
        %1258 = vmatpush.bf16.msra.mxu0 %v1141
        %1259 = vmatpush.bf16.msra.mxu0 %v1139
        %1260 = vmatpush.bf16.msra.mxu0 %v1137
        %1261 = vmatpush.bf16.msra.mxu0 %v1135
        %1262 = vmatpush.bf16.msra.mxu0 %v1133
        %1263 = vmatmul.bf16.gmra.mxu0 %v837
        %v1264 = vpop.f32.mrf.mxu0
        %v1265 = vadd.f32 %v1252, %v1264
        %v1266 = vpop.f32.mrf.mxu0
        %1267 = vdwg.mxu0
        %1268 = vmatpush.bf16.msra.mxu0 %v1163
        %1269 = vmatpush.bf16.msra.mxu0 %v1161
        %1270 = vmatpush.bf16.msra.mxu0 %v1159
        %1271 = vmatpush.bf16.msra.mxu0 %v1157
        %1272 = vmatpush.bf16.msra.mxu0 %v1155
        %1273 = vmatpush.bf16.msra.mxu0 %v1153
        %1274 = vmatpush.bf16.msra.mxu0 %v1151
        %1275 = vmatpush.bf16.msra.mxu0 %v1149
        %1276 = vmatmul.bf16.gmra.mxu0 %v838
        %v1277 = vpop.f32.mrf.mxu0
        %v1278 = vadd.f32 %v1265, %v1277
        %v1279 = vpop.f32.mrf.mxu0
        %1280 = vdwg.mxu0
        %1281 = vmatpush.bf16.msra.mxu0 %v1116
        %1282 = vmatpush.bf16.msra.mxu0 %v1114
        %1283 = vmatpush.bf16.msra.mxu0 %v1112
        %1284 = vmatpush.bf16.msra.mxu0 %v1110
        %1285 = vmatpush.bf16.msra.mxu0 %v1108
        %1286 = vmatpush.bf16.msra.mxu0 %v1106
        %1287 = vmatpush.bf16.msra.mxu0 %v1104
        %1288 = vmatpush.bf16.msra.mxu0 %v1102
        %1289 = vmatmul.bf16.gmra.mxu0 %v835
        %v1290 = vpop.f32.mrf.mxu0
        %v1291 = vadd.f32 %v906, %v1290
        %v1292 = vpop.f32.mrf.mxu0
        %1293 = vdwg.mxu0
        %1294 = vmatpush.bf16.msra.mxu0 %v1132
        %1295 = vmatpush.bf16.msra.mxu0 %v1130
        %1296 = vmatpush.bf16.msra.mxu0 %v1128
        %1297 = vmatpush.bf16.msra.mxu0 %v1126
        %1298 = vmatpush.bf16.msra.mxu0 %v1124
        %1299 = vmatpush.bf16.msra.mxu0 %v1122
        %1300 = vmatpush.bf16.msra.mxu0 %v1120
        %1301 = vmatpush.bf16.msra.mxu0 %v1118
        %1302 = vmatmul.bf16.gmra.mxu0 %v836
        %v1303 = vpop.f32.mrf.mxu0
        %v1304 = vadd.f32 %v1291, %v1303
        %v1305 = vpop.f32.mrf.mxu0
        %1306 = vdwg.mxu0
        %1307 = vmatpush.bf16.msra.mxu0 %v1148
        %1308 = vmatpush.bf16.msra.mxu0 %v1146
        %1309 = vmatpush.bf16.msra.mxu0 %v1144
        %1310 = vmatpush.bf16.msra.mxu0 %v1142
        %1311 = vmatpush.bf16.msra.mxu0 %v1140
        %1312 = vmatpush.bf16.msra.mxu0 %v1138
        %1313 = vmatpush.bf16.msra.mxu0 %v1136
        %1314 = vmatpush.bf16.msra.mxu0 %v1134
        %1315 = vmatmul.bf16.gmra.mxu0 %v837
        %v1316 = vpop.f32.mrf.mxu0
        %v1317 = vadd.f32 %v1304, %v1316
        %v1318 = vpop.f32.mrf.mxu0
        %1319 = vdwg.mxu0
        %1320 = vmatpush.bf16.msra.mxu0 %v1164
        %1321 = vmatpush.bf16.msra.mxu0 %v1162
        %1322 = vmatpush.bf16.msra.mxu0 %v1160
        %1323 = vmatpush.bf16.msra.mxu0 %v1158
        %1324 = vmatpush.bf16.msra.mxu0 %v1156
        %1325 = vmatpush.bf16.msra.mxu0 %v1154
        %1326 = vmatpush.bf16.msra.mxu0 %v1152
        %1327 = vmatpush.bf16.msra.mxu0 %v1150
        %1328 = vmatmul.bf16.gmra.mxu0 %v838
        %v1329 = vpop.f32.mrf.mxu0
        %v1330 = vadd.f32 %v1317, %v1329
        %v1331 = vpop.f32.mrf.mxu0
        %1332 = vdwg.mxu0
        %v1334 = vperm.slane %v547, 0
        %v1335 = vperm.slane %v547, 1
        %v1338 = vadd.f32 %v1278, %v1334
        %v1339 = vadd.f32 %v1330, %v1335
        %s1340 = sld [smem:[#allocation3]]
        %s1341 = scvt.s32.f32 %s1340
        %p1342 = scmp.ge.s32.totalorder %s1340, 30
        %p1343 = scmp.lt.s32.totalorder %s1340, 5
        %s1344 = ssub.f32 %s1341, 5.0
        %v1345 = vrcp.pop 25.0
        %v1346 = vmul.f32 25.0, %v1345
        %v1347 = vsub.f32 1.0, %v1346
        %v1348 = vmul.f32 %v1345, %v1347
        %v1349 = vadd.f32 %v1345, %v1348
        %vm1350 = vweird.f32 %v1345
        %v1351 = vsel %vm1350, %v1345, %v1349
        %s1352 = vtos %v1351
        %s1353 = smul.f32 %s1344, %s1352
        %s1354 = scalar_select %p1343, 0.0, %s1353
        %s1355 = scalar_select %p1342, 1.0, %s1354
        %v1356 = vld [vmem:[%s438] sm:$0xff]
        %v1357 = vld [vmem:[%s438 + $0x8] sm:$0xff]
        %v1358 = vstv %s1355
        %v1359 = vmul.f32 %v1356, %v1358
        %v1360 = vmul.f32 %v1357, %v1358
        %v1361 = vadd.f32 %v1338, %v1359
        %v1362 = vadd.f32 %v1339, %v1360
        %1363 = vst [vmem:[%s539] sm:$0xff] %v1361
        %1364 = vst [vmem:[%s539 + $0x8] sm:$0xff] %v1362
        %s1365 = sand.u32 %s245, 1
        %s1366 = scalar_lea.sflag [#allocation6], %s1365
        %s1367 = sand.u32 %s245, 1
        %s1368 = smul.addr %s1367, 16
        %s1369 = scalar_lea.vmem [#allocation16], %s1368
        // Predicated region
        $region77: #{_encoder_call.1} parent=47 // pred_check
          %p1370 = pneg %p255
        $region78: #{_encoder_call.1} parent=47 // pred_check_branch
          %1372 = sbr.rel (%p1370) target = $region80
        $region79: #{_encoder_call.1} parent=47 // pred_region
          %s1373 = smul.u32 2, %s40
          %1375 = vsyncadd %s1366, 0
          %s1376 = smul.addr %s39, 6
          %s1377 = sadd.s32 %s1373, %s1376
          %s1378 = smul.addr %s1377, 8
          %s1379 = scalar_lea.hbm %s8, %s1378
          %s1381 = sshll.u32 %s1369, 4
          %s1382 = int_to_ptr.vmem [resolvable:$true] %s1381
          %s1383 = sshll.u32 %s1379, 4
          %s1384 = int_to_ptr.hbm [resolvable:$true] %s1383
          %1386 = dma.vmem_to_hbm [thread:$0]  %s1382, 256, %s1384, %s1366
        $region80: #{_encoder_call.1} parent=47 // pred_fallthru
          _
      $region48: #{_encoder_call.1} parent=5 // pred_fallthru
        _
      %p1387 = scmp.le.s32.totalorder 2, %s30
      // Predicated region
      $region81: #{_encoder_call.1} parent=5 // pred_check
        %p1388 = pneg %p1387
      $region82: #{_encoder_call.1} parent=5 // pred_check_branch
        %1390 = sbr.rel (%p1388) target = $region84
      $region83: #{_encoder_call.1} parent=5 // pred_region
        %s1391 = ssub.s32 %s30, 2
        // Predicated region
        $region85: #{_encoder_call.1} parent=83 // pred_check
          %p1392 = pneg %p261
        $region86: #{_encoder_call.1} parent=83 // pred_check_branch
          %1394 = sbr.rel (%p1392) target = $region88
        $region87: #{_encoder_call.1} parent=83 // pred_region
          %s1395 = sand.u32 %s246, 1
          %s1396 = scalar_lea.sflag [#allocation6], %s1395
          %s1397 = sand.u32 %s246, 1
          %s1398 = smul.addr %s1397, 16
          %s1399 = scalar_lea.vmem [#allocation16], %s1398
          %1401 = dma.done %s1396, 256
        $region88: #{_encoder_call.1} parent=83 // pred_fallthru
          _
      $region84: #{_encoder_call.1} parent=5 // pred_fallthru
        _
    $region6: #{_encoder_call.1} parent=1 // loop_footer
      %s34 = sadd.s32 1, %s30
    $region7: #{_encoder_call.1} parent=1 // loop_footer_branch
      %29 = sbr.rel target = $region3
    $region8: #{_encoder_call.1} parent=1 // loop_exit
      _
    %1402 = vsyncpa [#allocation5], 1
    %s1403 = scalar_lea.sflag [#allocation5], 1
    %1404 = vsyncpa %s1403, 1
    %1405 = vsyncpa [#allocation8], 1
    %s1406 = scalar_lea.sflag [#allocation8], 1
    %1407 = vsyncpa %s1406, 1
    %1408 = vsyncpa [#allocation11], 1
    %s1409 = scalar_lea.sflag [#allocation11], 1
    %1410 = vsyncpa %s1409, 1
    %1411 = vsyncpa [#allocation14], 1
    %s1412 = scalar_lea.sflag [#allocation14], 1
    %1413 = vsyncpa %s1412, 1
    %1414 = vsyncpa [#allocation6], 1
    %s1415 = scalar_lea.sflag [#allocation6], 1
    %1416 = vsyncpa %s1415, 1

</llo_original>
